<compile_context>
chip_gen: v6e
topology: v6e:2x2x1
jax: 0.10.0
libtpu: 0.0.40
codegen_flags: <defaults>
</compile_context>

<pallas_src>
import jax
import jax.numpy as jnp
from jax.experimental import pallas as pl
from jax.experimental.pallas import tpu as pltpu


def _static_balancer_kernel(w_ref, loss_ref, out_ref):
    """All refs live in SMEM.

    w_ref:    (K,) f32 weights
    loss_ref: (K,) f32 scalar losses (dict-insertion order)
    out_ref:  (1,) f32 weighted sum
    """
    k = loss_ref.shape[0]  # static at trace time
    acc = jnp.float32(0.0)
    # Fully unrolled scalar FMA chain on the scalar ALU (K is tiny & static).
    for i in range(k):
        acc = acc + w_ref[i] * loss_ref[i]
    out_ref[0] = acc


class StaticBalancer:
    """JAX/Pallas port of ilploss.losses.StaticBalancer (forward pass)."""

    def __init__(self, weights: dict):
        # Keep insertion order of the dict, exactly like the PyTorch loop.
        self.keys = tuple(weights.keys())
        self.weights_vec = jnp.asarray(
            [float(weights[k]) for k in self.keys], dtype=jnp.float32
        )

        @jax.jit
        def _fwd(w_vec, *losses):
            # Stack the scalar losses; XLA fuses this under the same jit.
            loss_vec = jnp.stack(
                [jnp.asarray(l, dtype=jnp.float32).reshape(()) for l in losses]
            )
            out = pl.pallas_call(
                _static_balancer_kernel,
                out_shape=jax.ShapeDtypeStruct((1,), jnp.float32),
                in_specs=[
                    pl.BlockSpec(memory_space=pltpu.MemorySpace.SMEM),
                    pl.BlockSpec(memory_space=pltpu.MemorySpace.SMEM),
                ],
                out_specs=pl.BlockSpec(memory_space=pltpu.MemorySpace.SMEM),
            )(w_vec, loss_vec)
            return out[0]

        self._fwd = _fwd

    def __call__(self, loss_dict: dict) -> jax.Array:
        # Pull losses in the same key order as the weights.
        return self._fwd(self.weights_vec, *[loss_dict[k] for k in self.keys])

    def fused_reference(self, loss_dict: dict) -> jax.Array:
        """Recommended non-Pallas path: fused XLA dot (zero custom-call cost)."""
        loss_vec = jnp.stack(
            [jnp.asarray(loss_dict[k], jnp.float32).reshape(()) for k in self.keys]
        )
        return jnp.dot(loss_vec, self.weights_vec)


if __name__ == "__main__":
    # Deterministic synthetic weights (the module's __init__ just stores a dict).
    weights = {"ce": 0.5, "reg": 1.5, "aux": 2.0, "kl": 0.25}

    # Deterministic example scalar losses.
    key = jax.random.PRNGKey(0)
    raw = jax.random.uniform(key, (len(weights),), dtype=jnp.float32)
    loss_dict = {k: raw[i] for i, k in enumerate(weights.keys())}

    balancer = StaticBalancer(weights)
    out = balancer(loss_dict)
    out = jax.block_until_ready(out)

    # Pure-JAX reference check (same semantics as the PyTorch loop).
    ref = sum(weights[k] * loss_dict[k] for k in weights)
    assert jnp.allclose(out, ref, rtol=1e-6, atol=1e-6), (out, ref)

    # Also check the recommended fused-XLA path agrees.
    fused = jax.block_until_ready(balancer.fused_reference(loss_dict))
    assert jnp.allclose(fused, ref, rtol=1e-6, atol=1e-6), (fused, ref)

    # Weights-as-operand: new weights of the same K reuse the compiled kernel
    # (no closure bake, no Mosaic recompile), and still give the right answer.
    weights2 = {"ce": 1.0, "reg": 0.1, "aux": 0.0, "kl": 3.0}
    balancer2 = StaticBalancer(weights2)
    out2 = jax.block_until_ready(balancer2(loss_dict))
    ref2 = sum(weights2[k] * loss_dict[k] for k in weights2)
    assert jnp.allclose(out2, ref2, rtol=1e-6, atol=1e-6), (out2, ref2)

    print("KERNEL_OK")
</pallas_src>

<mosaic_0001>
module attributes {stable_mosaic.version = 11 : i64} {
  func.func @_static_balancer_kernel(%arg0: memref<4xf32, #tpu.memory_space<smem>>, %arg1: memref<4xf32, #tpu.memory_space<smem>>, %arg2: memref<1xf32, #tpu.memory_space<smem>>) attributes {dimension_semantics = [], scalar_prefetch = 0 : i64, scratch_operands = 0 : i64, tpu.core_type = #tpu.core_type<tc>} {
    %c0 = arith.constant 0 : index
    %0 = memref.load %arg0[%c0] : memref<4xf32, #tpu.memory_space<smem>>
    %c0_0 = arith.constant 0 : index
    %1 = memref.load %arg1[%c0_0] : memref<4xf32, #tpu.memory_space<smem>>
    %2 = arith.mulf %0, %1 : f32
    %cst = arith.constant 0.000000e+00 : f32
    %3 = arith.addf %cst, %2 : f32
    %c1 = arith.constant 1 : index
    %4 = memref.load %arg0[%c1] : memref<4xf32, #tpu.memory_space<smem>>
    %c1_1 = arith.constant 1 : index
    %5 = memref.load %arg1[%c1_1] : memref<4xf32, #tpu.memory_space<smem>>
    %6 = arith.mulf %4, %5 : f32
    %7 = arith.addf %3, %6 : f32
    %c2 = arith.constant 2 : index
    %8 = memref.load %arg0[%c2] : memref<4xf32, #tpu.memory_space<smem>>
    %c2_2 = arith.constant 2 : index
    %9 = memref.load %arg1[%c2_2] : memref<4xf32, #tpu.memory_space<smem>>
    %10 = arith.mulf %8, %9 : f32
    %11 = arith.addf %7, %10 : f32
    %c3 = arith.constant 3 : index
    %12 = memref.load %arg0[%c3] : memref<4xf32, #tpu.memory_space<smem>>
    %c3_3 = arith.constant 3 : index
    %13 = memref.load %arg1[%c3_3] : memref<4xf32, #tpu.memory_space<smem>>
    %14 = arith.mulf %12, %13 : f32
    %15 = arith.addf %11, %14 : f32
    %c0_4 = arith.constant 0 : index
    %16 = memref.load %arg2[%c0_4] : memref<1xf32, #tpu.memory_space<smem>>
    memref.store %15, %arg2[%c0_4] : memref<1xf32, #tpu.memory_space<smem>>
    return
  }
}

</mosaic_0001>

<llo_original>
// kernel: _fwd.1
$region0: #{_fwd.1}
  #allocation0 [shape = 'u32[]', space=smem, size = 0x4, offset = 0x4, fixed_abs, tag = 'smem constant byte address 0x4 - core index']
  #allocation1 [shape = 'u32[144,128]{1,0:T(1,128)}', space=vmem, size = 0x12000, scoped, tag = 'internal scratch']
  %s0 = inlined_call_operand.vmem [shape: f32[4], index: 0, kind: input, shape index: {}]
  %s1 = inlined_call_operand.vmem [shape: f32[4], index: 1, kind: input, shape index: {}]
  %s2 = inlined_call_operand.hbm [shape: f32[1], index: 2, kind: output, shape index: {}]
  %s3 = sld [smem:[#allocation0]]
  $region26: #{_fwd.1} parent=0
    _
  %s5 = ssub.s32 1, %s3
  %s6 = scalar_select 0, %s5, %s3
  $region1: #{_fwd.1} parent=0
    #allocation2 [shape = 'u8[512]{0}', space=smem, size = 0x200, scoped, tag = 'input window, operand 0, single buffered']
    #allocation3 [shape = 's32[1]{0}', space=sflag, size = 0x4, scoped, tag = 'scoped memory for _fwd.1']
    #allocation4 [shape = 's32[1]{0}', space=sflag, size = 0x4, scoped, tag = 'scoped memory for _fwd.1']
    #allocation5 [shape = 'u8[512]{0}', space=smem, size = 0x200, scoped, tag = 'input window, operand 1, single buffered']
    #allocation6 [shape = 's32[1]{0}', space=sflag, size = 0x4, scoped, tag = 'scoped memory for _fwd.1']
    #allocation7 [shape = 'u8[512]{0}', space=smem, size = 0x200, scoped, tag = 'output window, operand 0, single buffered']
    %7 = vsyncpa [#allocation4], 0
    %8 = vsyncpa [#allocation6], 0
    %9 = vsyncpa [#allocation3], 0
    // Predicated region
    $region2: #{_fwd.1} parent=1 // pred_check
      _
    $region3: #{_fwd.1} parent=1 // pred_check_branch
      %11 = sbr.rel (0) target = $region5
    $region4: #{_fwd.1} parent=1 // pred_region
      %s13 = ssub.s32 16, 16
      %14 = vsyncadd [#allocation4], %s13
      %s16 = sshll.u32 %s0, 4
      %s17 = int_to_ptr.vmem [resolvable:$true] %s16
      %19 = dma.vmem_to_smem %s17, 16, [#allocation2], [#allocation4]
    $region5: #{_fwd.1} parent=1 // pred_fallthru
      _
    // Predicated region
    $region6: #{_fwd.1} parent=1 // pred_check
      _
    $region7: #{_fwd.1} parent=1 // pred_check_branch
      %21 = sbr.rel (0) target = $region9
    $region8: #{_fwd.1} parent=1 // pred_region
      %s23 = ssub.s32 16, 16
      %24 = vsyncadd [#allocation6], %s23
      %s26 = sshll.u32 %s1, 4
      %s27 = int_to_ptr.vmem [resolvable:$true] %s26
      %29 = dma.vmem_to_smem %s27, 16, [#allocation5], [#allocation6]
    $region9: #{_fwd.1} parent=1 // pred_fallthru
      _
    // Predicated region
    $region10: #{_fwd.1} parent=1 // pred_check
      _
    $region11: #{_fwd.1} parent=1 // pred_check_branch
      %31 = sbr.rel (0) target = $region13
    $region12: #{_fwd.1} parent=1 // pred_region
      %32 = dma.done [#allocation4], 16
    $region13: #{_fwd.1} parent=1 // pred_fallthru
      _
    // Predicated region
    $region14: #{_fwd.1} parent=1 // pred_check
      _
    $region15: #{_fwd.1} parent=1 // pred_check_branch
      %34 = sbr.rel (0) target = $region17
    $region16: #{_fwd.1} parent=1 // pred_region
      %35 = dma.done [#allocation6], 16
    $region17: #{_fwd.1} parent=1 // pred_fallthru
      _
    %36 = sfence
    %s37 = sld [smem:[#allocation2]]
    %s38 = sld [smem:[#allocation5]]
    %s39 = smul.f32 %s37, %s38
    %s40 = sadd.f32 %s39, 0.0
    %s41 = sld [smem:[#allocation2 + $0x1]]
    %s42 = sld [smem:[#allocation5 + $0x1]]
    %s43 = smul.f32 %s41, %s42
    %s44 = sadd.f32 %s40, %s43
    %s45 = sld [smem:[#allocation2 + $0x2]]
    %s46 = sld [smem:[#allocation5 + $0x2]]
    %s47 = smul.f32 %s45, %s46
    %s48 = sadd.f32 %s44, %s47
    %s49 = sld [smem:[#allocation2 + $0x3]]
    %s50 = sld [smem:[#allocation5 + $0x3]]
    %s51 = smul.f32 %s49, %s50
    %s52 = sadd.f32 %s48, %s51
    %s53 = scalar_lea.smem [#allocation7], 0
    %54 = sst [smem:[%s53]] %s52
    // Predicated region
    $region18: #{_fwd.1} parent=1 // pred_check
      _
    $region19: #{_fwd.1} parent=1 // pred_check_branch
      %56 = sbr.rel (0) target = $region21
    $region20: #{_fwd.1} parent=1 // pred_region
      %s58 = ssub.s32 16, 16
      %59 = vsyncadd [#allocation3], %s58
      %62 = dma.smem_to_hbm [#allocation7], 16, %s2, [#allocation3]
    $region21: #{_fwd.1} parent=1 // pred_fallthru
      _
    // Predicated region
    $region22: #{_fwd.1} parent=1 // pred_check
      _
    $region23: #{_fwd.1} parent=1 // pred_check_branch
      %64 = sbr.rel (0) target = $region25
    $region24: #{_fwd.1} parent=1 // pred_region
      %65 = dma.done [#allocation3], 16
    $region25: #{_fwd.1} parent=1 // pred_fallthru
      _
    %66 = sfence
    %67 = vsyncpa [#allocation3], 1
    %68 = vsyncpa [#allocation4], 1
    %69 = vsyncpa [#allocation6], 1

</llo_original>
